<compile_context>
chip_gen: v5e
topology: v5e:2x2
jax: 0.10.0
libtpu: 0.0.40
codegen_flags: <defaults>
</compile_context>

<pallas_src>
import functools

import jax
import jax.numpy as jnp
from jax.experimental import pallas as pl
from jax.experimental.pallas import tpu as pltpu


# ----------------------------- kernels -------------------------------------


def hlayer_step_kernel(r_ref, w_ref, b_ref, o_ref, *, cast_bf16):
    """Single step: out = r @ w_eff.T + bias (w_eff precomputed in wrapper)."""
    r = r_ref[...]
    w = w_ref[...]
    if cast_bf16:  # MXU-native operands on v6e/v7x; accumulation stays f32.
        r = r.astype(jnp.bfloat16)
        w = w.astype(jnp.bfloat16)
    out = jax.lax.dot_general(
        r, w,
        dimension_numbers=(((1,), (1,)), ((), ())),   # r @ w.T, no transpose mat.
        preferred_element_type=jnp.float32)
    o_ref[...] = out + b_ref[...]                     # (B,H) + (1,H) broadcast


def hlayer_recurrent_kernel(r0_ref, w_ref, b_ref, o_ref, state_ref, *, cast_bf16):
    """Fused T-step recurrence: state <- state @ w_eff.T + bias each grid step.

    Weight / bias BlockSpecs are constant across the grid, so they are DMA'd
    once and stay VMEM-resident; the recurrent state never round-trips HBM.
    """
    t = pl.program_id(0)

    @pl.when(t == 0)
    def _():
        state_ref[...] = r0_ref[...]

    r = state_ref[...]
    w = w_ref[...]
    if cast_bf16:
        r = r.astype(jnp.bfloat16)
        w = w.astype(jnp.bfloat16)
    out = jax.lax.dot_general(
        r, w,
        dimension_numbers=(((1,), (1,)), ((), ())),
        preferred_element_type=jnp.float32) + b_ref[...]
    state_ref[...] = out          # carry to next grid step (scratch persists)
    o_ref[0] = out                # per-step output block (1, Bp, Hp)


# ----------------------------- wrappers -------------------------------------


def _pad2d(x, rows, cols):
    r, c = x.shape
    return jnp.pad(x, ((0, rows - r), (0, cols - c)))


def prepare_hlayer_params(weight, sign, bias, *, apply_dale=True):
    """Fold relu + Dale diag-mask into one effective weight and pad ONCE.

    Call this once per parameter update; the per-step forward only touches r_t.
    Returns (w_eff_padded (Hp,Hp) f32, bias_padded (1,Hp) f32).
    """
    H = weight.shape[0]
    Hp = max(128, pl.cdiv(H, 128) * 128)
    if apply_dale:
        # (relu(W) @ diag(s)) == relu(W) * s[None, :]  (exact, mask is diagonal ±1)
        w_eff = jnp.maximum(weight.astype(jnp.float32), 0.0) * sign.reshape(1, H)
    else:
        # PyTorch apply_dale=False path uses the raw weight (no relu, no mask).
        w_eff = weight.astype(jnp.float32)
    w_eff_p = _pad2d(w_eff, Hp, Hp)
    b_p = _pad2d(bias.reshape(1, H).astype(jnp.float32), 1, Hp)
    return w_eff_p, b_p


@jax.jit
def hlayer_forward(r_t, w_eff_p, bias_p):
    """One HLayer step: out = r_t @ w_eff.T + bias. Only r_t is padded here."""
    B, H = r_t.shape
    Hp = w_eff_p.shape[0]
    Bp = max(8, pl.cdiv(B, 8) * 8)
    r_p = _pad2d(r_t.astype(jnp.float32), Bp, Hp)
    cast_bf16 = Hp >= 256   # only worth it once the MXU tile is actually filled

    cost = pl.CostEstimate(
        flops=2 * Bp * Hp * Hp,
        transcendentals=0,
        bytes_accessed=4 * (Bp * Hp + Hp * Hp + Hp + Bp * Hp))

    out_p = pl.pallas_call(
        functools.partial(hlayer_step_kernel, cast_bf16=cast_bf16),
        out_shape=jax.ShapeDtypeStruct((Bp, Hp), jnp.float32),
        in_specs=[
            pl.BlockSpec((Bp, Hp), lambda: (0, 0)),
            pl.BlockSpec((Hp, Hp), lambda: (0, 0)),
            pl.BlockSpec((1, Hp), lambda: (0, 0)),
        ],
        out_specs=pl.BlockSpec((Bp, Hp), lambda: (0, 0)),
        cost_estimate=cost,
    )(r_p, w_eff_p, bias_p)

    # Zero padding is exact; slice back to the logical shape.
    return out_p[:B, :H]


@functools.partial(jax.jit, static_argnames=("num_steps",))
def hlayer_forward_steps(r_t, w_eff_p, bias_p, *, num_steps):
    """Apply the HLayer forward num_steps times inside ONE pallas_call.

    Returns all intermediate outputs, shape (num_steps, B, H);
    outs[t] == HLayer^(t+1)(r_t).
    """
    B, H = r_t.shape
    Hp = w_eff_p.shape[0]
    Bp = max(8, pl.cdiv(B, 8) * 8)
    r_p = _pad2d(r_t.astype(jnp.float32), Bp, Hp)
    cast_bf16 = Hp >= 256

    cost = pl.CostEstimate(
        flops=2 * Bp * Hp * Hp * num_steps,
        transcendentals=0,
        bytes_accessed=4 * (Bp * Hp + Hp * Hp + Hp + num_steps * Bp * Hp))

    outs_p = pl.pallas_call(
        functools.partial(hlayer_recurrent_kernel, cast_bf16=cast_bf16),
        out_shape=jax.ShapeDtypeStruct((num_steps, Bp, Hp), jnp.float32),
        grid_spec=pltpu.PrefetchScalarGridSpec(
            num_scalar_prefetch=0,
            grid=(num_steps,),
            in_specs=[
                pl.BlockSpec((Bp, Hp), lambda t: (0, 0)),   # r0 (used at t==0)
                pl.BlockSpec((Hp, Hp), lambda t: (0, 0)),   # weight: resident
                pl.BlockSpec((1, Hp), lambda t: (0, 0)),    # bias:   resident
            ],
            out_specs=pl.BlockSpec((1, Bp, Hp), lambda t: (t, 0, 0)),
            scratch_shapes=[pltpu.VMEM((Bp, Hp), jnp.float32)],  # recurrent state
        ),
        compiler_params=pltpu.CompilerParams(
            dimension_semantics=("arbitrary",)),   # sequential recurrence
        cost_estimate=cost,
    )(r_p, w_eff_p, bias_p)

    return outs_p[:, :B, :H]


# ----------------------------- init (mirrors HLayer.__init__) ---------------


def init_hlayer_params(key, h_size=32, p_rec=0.2, p_inh=0.2, w_gain=1.5,
                       apply_dale=True, w_dist="gaus"):
    """Deterministic re-implementation of HLayer parameter setup.

    Returns the Dale mask as its diagonal sign vector (h_size,) instead of the
    full (h_size, h_size) matrix — the forward folds it algebraically.
    """
    k_inh, k_conn, k_w = jax.random.split(key, 3)

    if apply_dale:
        inh = jax.random.uniform(k_inh, (h_size,)) < p_inh
    else:
        inh = jnp.zeros((h_size,), dtype=bool)

    conn = jax.random.uniform(k_conn, (h_size, h_size)) < p_rec
    gauss = jax.random.normal(k_w, (h_size, h_size), dtype=jnp.float32)
    w_hid = jnp.where(conn, gauss, 0.0)
    if w_dist == "gaus":
        w_hid = w_hid / jnp.sqrt(jnp.float32(h_size) * jnp.float32(p_rec)) * w_gain
    # TODO(synk): gamma-distributed weight branch not implemented (gaus default).

    if apply_dale:
        w_hid = jnp.abs(w_hid)
        sign = jnp.where(inh, -1.0, 1.0).astype(jnp.float32)
    else:
        sign = jnp.ones((h_size,), dtype=jnp.float32)

    bias = jnp.zeros((h_size,), dtype=jnp.float32)
    return w_hid.astype(jnp.float32), sign, bias


# ----------------------------- test ------------------------------------------


if __name__ == "__main__":
    key = jax.random.PRNGKey(0)
    h_size = 32
    batch = 2
    num_steps = 8

    k_params, k_input = jax.random.split(key)
    weight, sign, bias = init_hlayer_params(k_params, h_size=h_size, apply_dale=True)
    r_t = jax.random.normal(k_input, (batch, h_size), dtype=jnp.float32)

    # Reference effective weight with the ORIGINAL semantics (full diag-mask matmul).
    mask = jnp.diag(sign)
    w_eff_ref = jnp.dot(jnp.maximum(weight, 0.0), mask)

    # --- single step, apply_dale=True (sign-folded, params pre-padded once) ---
    w_p, b_p = prepare_hlayer_params(weight, sign, bias, apply_dale=True)
    out = jax.block_until_ready(hlayer_forward(r_t, w_p, b_p))
    ref = jnp.dot(r_t, w_eff_ref.T) + bias
    assert out.shape == (batch, h_size)
    assert jnp.allclose(out, ref, atol=1e-5, rtol=1e-5)

    # --- single step, apply_dale=False (raw weight, no relu / no mask) ---
    w_p_nd, b_p_nd = prepare_hlayer_params(weight, sign, bias, apply_dale=False)
    out_nd = jax.block_until_ready(hlayer_forward(r_t, w_p_nd, b_p_nd))
    ref_nd = jnp.dot(r_t, weight.T) + bias
    assert jnp.allclose(out_nd, ref_nd, atol=1e-5, rtol=1e-5)

    # --- fused T-step recurrent application (one pallas_call) ---
    outs = jax.block_until_ready(
        hlayer_forward_steps(r_t, w_p, b_p, num_steps=num_steps))
    assert outs.shape == (num_steps, batch, h_size)
    r_ref = r_t
    for t in range(num_steps):
        r_ref = jnp.dot(r_ref, w_eff_ref.T,
                        precision=jax.lax.Precision.HIGHEST) + bias
        denom = jnp.max(jnp.abs(r_ref)) + 1e-6
        rel_err = jnp.max(jnp.abs(outs[t] - r_ref)) / denom
        assert float(rel_err) < 1e-4, f"step {t}: rel_err={float(rel_err)}"

    print("KERNEL_OK")
</pallas_src>

<mosaic_0001>
module attributes {stable_mosaic.version = 11 : i64} {
  func.func @hlayer_step_kernel(%arg0: memref<8x128xf32, #tpu.memory_space<vmem>>, %arg1: memref<128x128xf32, #tpu.memory_space<vmem>>, %arg2: memref<1x128xf32, #tpu.memory_space<vmem>>, %arg3: memref<8x128xf32, #tpu.memory_space<vmem>>) attributes {dimension_semantics = [], scalar_prefetch = 0 : i64, scratch_operands = 0 : i64, tpu.core_type = #tpu.core_type<tc>} {
    %c0 = arith.constant 0 : index
    %c0_0 = arith.constant 0 : index
    %0 = vector.load %arg0[%c0, %c0_0] : memref<8x128xf32, #tpu.memory_space<vmem>>, vector<8x128xf32>
    %c0_1 = arith.constant 0 : index
    %c0_2 = arith.constant 0 : index
    %1 = vector.load %arg1[%c0_1, %c0_2] : memref<128x128xf32, #tpu.memory_space<vmem>>, vector<128x128xf32>
    %cst = arith.constant dense<0.000000e+00> : vector<8x128xf32>
    %2 = tpu.matmul %0, %1, %cst {dimension_numbers = #tpu.dot_dimension_numbers<[1], [1], [0], [0], [0, 0, 1, 0], [], []>} : vector<8x128xf32>, vector<128x128xf32>, vector<8x128xf32> -> vector<8x128xf32>
    %c0_3 = arith.constant 0 : index
    %c0_4 = arith.constant 0 : index
    %3 = vector.load %arg2[%c0_3, %c0_4] : memref<1x128xf32, #tpu.memory_space<vmem>>, vector<1x128xf32>
    %4 = vector.broadcast %3 : vector<1x128xf32> to vector<8x128xf32>
    %5 = arith.addf %2, %4 : vector<8x128xf32>
    %c0_5 = arith.constant 0 : index
    %c0_6 = arith.constant 0 : index
    %6 = vector.load %arg3[%c0_5, %c0_6] : memref<8x128xf32, #tpu.memory_space<vmem>>, vector<8x128xf32>
    tpu.vector_store %arg3[%c0_5, %c0_6], %5 {strides = array<i32>} : memref<8x128xf32, #tpu.memory_space<vmem>>, vector<8x128xf32>,
    return
  }
}

</mosaic_0001>

<llo_original>
// kernel: hlayer_forward.1
$region0: #{hlayer_forward.1}
  #allocation0 [shape = 'u32[]', space=smem, size = 0x4, offset = 0x4, fixed_abs, tag = 'smem constant byte address 0x4 - core index']
  #allocation1 [shape = 'u32[72,128]{1,0:T(1,128)}', space=vmem, size = 0x9000, scoped, tag = 'internal scratch']
  %s0 = inlined_call_operand.vmem [shape: f32[8,128], index: 0, kind: input, shape index: {}]
  %s1 = inlined_call_operand.hbm [shape: f32[128,128], index: 1, kind: input, shape index: {}]
  %s2 = inlined_call_operand.vmem [shape: f32[1,128], index: 2, kind: input, shape index: {}]
  %s3 = inlined_call_operand.vmem [shape: f32[8,128], index: 3, kind: output, shape index: {}]
  %s4 = sld [smem:[#allocation0]]
  $region26: #{hlayer_forward.1} parent=0
    _
  %s6 = ssub.s32 1, %s4
  %s7 = scalar_select 0, %s6, %s4
  $region1: #{hlayer_forward.1} parent=0
    #allocation2 [shape = 'u8[65536]{0}', space=vmem, size = 0x10000, scoped, tag = 'input window, operand 1, single buffered']
    #allocation3 [shape = 's32[1]{0}', space=sflag, size = 0x4, scoped, tag = 'scoped memory for hlayer_forward.1']
    %8 = vsyncpa [#allocation3], 0
    // Predicated region
    $region2: #{hlayer_forward.1} parent=1 // pred_check
      _
    $region3: #{hlayer_forward.1} parent=1 // pred_check_branch
      %10 = sbr.rel (0) target = $region5
    $region4: #{hlayer_forward.1} parent=1 // pred_region
      _
    $region5: #{hlayer_forward.1} parent=1 // pred_fallthru
      _
    // Predicated region
    $region6: #{hlayer_forward.1} parent=1 // pred_check
      _
    $region7: #{hlayer_forward.1} parent=1 // pred_check_branch
      %12 = sbr.rel (0) target = $region9
    $region8: #{hlayer_forward.1} parent=1 // pred_region
      %14 = vsyncadd [#allocation3], 0
      %s15 = sshll.u32 %s1, 4
      %s16 = int_to_ptr.hbm [resolvable:$true] %s15
      %s17 = sshll.u32 [#allocation2], 4
      %s18 = int_to_ptr.vmem [resolvable:$true] %s17
      %23 = dma.hbm_to_vmem [thread:$0]  %s16, 2048, %s18, [#allocation3], 128, 128, 8
    $region9: #{hlayer_forward.1} parent=1 // pred_fallthru
      _
    // Predicated region
    $region10: #{hlayer_forward.1} parent=1 // pred_check
      _
    $region11: #{hlayer_forward.1} parent=1 // pred_check_branch
      %25 = sbr.rel (0) target = $region13
    $region12: #{hlayer_forward.1} parent=1 // pred_region
      _
    $region13: #{hlayer_forward.1} parent=1 // pred_fallthru
      _
    // Predicated region
    $region14: #{hlayer_forward.1} parent=1 // pred_check
      _
    $region15: #{hlayer_forward.1} parent=1 // pred_check_branch
      %27 = sbr.rel (0) target = $region17
    $region16: #{hlayer_forward.1} parent=1 // pred_region
      %29 = dma.done [#allocation3], 2048
    $region17: #{hlayer_forward.1} parent=1 // pred_fallthru
      _
    %v30 = vld [vmem:[%s0] sm:$0xff]
    %v31 = vld [vmem:[#allocation2] sm:$0xff]
    %v32 = vld [vmem:[#allocation2 + $0x8] sm:$0xff]
    %v33 = vld [vmem:[#allocation2 + $0x10] sm:$0xff]
    %v34 = vld [vmem:[#allocation2 + $0x18] sm:$0xff]
    %v35 = vld [vmem:[#allocation2 + $0x20] sm:$0xff]
    %v36 = vld [vmem:[#allocation2 + $0x28] sm:$0xff]
    %v37 = vld [vmem:[#allocation2 + $0x30] sm:$0xff]
    %v38 = vld [vmem:[#allocation2 + $0x38] sm:$0xff]
    %v39 = vld [vmem:[#allocation2 + $0x40] sm:$0xff]
    %v40 = vld [vmem:[#allocation2 + $0x48] sm:$0xff]
    %v41 = vld [vmem:[#allocation2 + $0x50] sm:$0xff]
    %v42 = vld [vmem:[#allocation2 + $0x58] sm:$0xff]
    %v43 = vld [vmem:[#allocation2 + $0x60] sm:$0xff]
    %v44 = vld [vmem:[#allocation2 + $0x68] sm:$0xff]
    %v45 = vld [vmem:[#allocation2 + $0x70] sm:$0xff]
    %v46 = vld [vmem:[#allocation2 + $0x78] sm:$0xff]
    %v47 = vld [vmem:[%s2] sm:$0x1]
    %v49 = vperm.slane %v47, 0
    %51 = vmatpush.xpose.msra.mxu0 %v46
    %52 = vmatpush.xpose.msra.mxu0 %v45
    %53 = vmatpush.xpose.msra.mxu0 %v44
    %54 = vmatpush.xpose.msra.mxu0 %v43
    %55 = vmatpush.xpose.msra.mxu0 %v42
    %56 = vmatpush.xpose.msra.mxu0 %v41
    %57 = vmatpush.xpose.msra.mxu0 %v40
    %58 = vmatpush.xpose.msra.mxu0 %v39
    %59 = vmatpush.xpose.msra.mxu0 %v38
    %60 = vmatpush.xpose.msra.mxu0 %v37
    %61 = vmatpush.xpose.msra.mxu0 %v36
    %62 = vmatpush.xpose.msra.mxu0 %v35
    %63 = vmatpush.xpose.msra.mxu0 %v34
    %64 = vmatpush.xpose.msra.mxu0 %v33
    %65 = vmatpush.xpose.msra.mxu0 %v32
    %66 = vmatpush.xpose.msra.mxu0 %v31
    %67 = vmatmul.f32.gmra.mxu0 %v30
    %v68 = vpop.f32.mrf.mxu0
    %v69 = vadd.f32 %v49, %v68
    %70 = vdwg.mxu0
    %71 = vst [vmem:[%s3] sm:$0xff] %v69
    // Predicated region
    $region18: #{hlayer_forward.1} parent=1 // pred_check
      _
    $region19: #{hlayer_forward.1} parent=1 // pred_check_branch
      %73 = sbr.rel (0) target = $region21
    $region20: #{hlayer_forward.1} parent=1 // pred_region
      _
    $region21: #{hlayer_forward.1} parent=1 // pred_fallthru
      _
    // Predicated region
    $region22: #{hlayer_forward.1} parent=1 // pred_check
      _
    $region23: #{hlayer_forward.1} parent=1 // pred_check_branch
      %75 = sbr.rel (0) target = $region25
    $region24: #{hlayer_forward.1} parent=1 // pred_region
      _
    $region25: #{hlayer_forward.1} parent=1 // pred_fallthru
      _
    %76 = vsyncpa [#allocation3], 1

</llo_original>
